<compile_context>
chip_gen: v6e
topology: v6e:2x2x1
jax: 0.10.0
libtpu: 0.0.40
codegen_flags: <defaults>
</compile_context>

<pallas_src>
import functools

import numpy as np
import jax
import jax.numpy as jnp
from jax import lax
from jax.experimental import pallas as pl
from jax.experimental.pallas import tpu as pltpu


# ----------------------------------------------------------------------------
# Kernel bodies
# ----------------------------------------------------------------------------


def _dense_kernel(x_ref, w_ref, o_ref):
    # x_ref: (tm, T) row tile of (batch*n, T); w_ref: (T, w) resident f32 weights.
    x = x_ref[...].astype(jnp.float32)  # bf16 X is cast here; W stays exact f32
    o_ref[...] = jnp.dot(x, w_ref[...], preferred_element_type=jnp.float32)


def _make_banded_kernel(*, KB, num_kb, T, S):
    def kernel(x_ref, w_ref, o_ref, acc_ref):
        s = pl.program_id(2)

        @pl.when(s == 0)
        def _():
            acc_ref[...] = jnp.zeros_like(acc_ref)

        x = x_ref[...].astype(jnp.float32)
        if T % KB != 0:
            # The last K block is ragged: zero the stale-VMEM tail so garbage
            # (possibly NaN) never reaches the MXU even though its weights are 0.
            kb = jnp.minimum(pl.program_id(1) + s, num_kb - 1)
            k_idx = lax.broadcasted_iota(jnp.int32, x.shape, 1) + kb * KB
            x = jnp.where(k_idx < T, x, 0.0)

        acc_ref[...] += jnp.dot(x, w_ref[...], preferred_element_type=jnp.float32)

        @pl.when(s == S - 1)
        def _():
            o_ref[...] = acc_ref[...]

    return kernel


# ----------------------------------------------------------------------------
# Cached weight construction (host-side numpy; built once per (T, d, stride))
# ----------------------------------------------------------------------------


@functools.lru_cache(maxsize=64)
def _dense_weights(T, d, stride):
    """Dense banded (T, w) f32 weight matrix."""
    w_count = (T - d) // stride + 1
    wts = np.arange(1, d + 1, dtype=np.float64)
    wts = (wts / wts.sum()).astype(np.float32)
    W = np.zeros((T, w_count), dtype=np.float32)
    cols = np.arange(w_count)
    rows = cols[None, :] * stride + np.arange(d)[:, None]  # (d, w) absolute K rows
    W[rows, cols[None, :]] = wts[:, None]
    return jax.device_put(W)


@functools.lru_cache(maxsize=64)
def _banded_weights(T, d, stride, tw):
    """Compact banded weights: (num_j, S, KB, tw), KB = tw*stride."""
    w_count = (T - d) // stride + 1
    KB = tw * stride
    band_len = (tw - 1) * stride + d
    S = -(-band_len // KB)            # K blocks spanned by one output-column block
    num_j = -(-w_count // tw)
    wts = np.arange(1, d + 1, dtype=np.float64)
    wts = (wts / wts.sum()).astype(np.float32)

    Wb = np.zeros((num_j, S, KB, tw), dtype=np.float32)
    col = np.arange(w_count)
    j = col // tw
    c = col % tw
    off = c[:, None] * stride + np.arange(d)[None, :]   # offset inside block-j band
    s = off // KB
    k = off % KB
    Wb[j[:, None], s, k, c[:, None]] = wts[None, :]
    return jax.device_put(Wb), KB, S, num_j


# ----------------------------------------------------------------------------
# Planning helpers (generation-aware VMEM, data-sized row tiles)
# ----------------------------------------------------------------------------


def _vmem_plan():
    """Consistent (vmem_limit_bytes, picker budget): ~96 MiB on v5e/v6e (128 MiB
    physical), ~48 MiB on v7x (64 MiB per TensorCore)."""
    try:
        cap = int(pltpu.get_tpu_info().vmem_capacity_bytes)
    except Exception:
        cap = 64 * 1024 * 1024            # conservative fallback (v7x per-TC VMEM)
    limit = (cap * 3) // 4
    budget = limit - 2 * 1024 * 1024      # headroom for compiler-internal scratch
    return limit, budget


def _pick_row_tile(rows, *, dma_row_bytes, vmem_row_bytes, budget):
    """Row tile: move ~>=2 MiB of X per grid step (per-step overhead ~0.35 us),
    keep >=2 grid steps when rows allow (v7x has two TensorCores), shrink to the
    VMEM budget, and keep MXU/lane-friendly granularity."""
    cand = max(256, pl.cdiv(2 * 1024 * 1024, dma_row_bytes))
    cand = min(cand, 4096)
    if rows >= 16:
        cand = min(cand, pl.cdiv(rows, 2))        # >=2 grid points on the row axis
    while cand > 8 and cand * vmem_row_bytes > budget:
        cand //= 2
    if cand >= 512:
        cand = (cand // 256) * 256                # 128/256-aligned when large
    if cand >= rows:
        return rows                               # full-extent block is always legal
    return max(8, (cand // 8) * 8)


# ----------------------------------------------------------------------------
# pallas_call runners
# ----------------------------------------------------------------------------


@functools.partial(jax.jit, static_argnames=("tm", "vmem_limit"))
def _run_dense(X, W, *, tm, vmem_limit):
    batch, n, T = X.shape
    w_count = W.shape[1]
    rows = batch * n
    X2 = X.reshape(rows, T)
    if X2.dtype != jnp.bfloat16 and X2.dtype != jnp.float32:
        X2 = X2.astype(jnp.float32)
    itemsize = X2.dtype.itemsize

    cost = pl.CostEstimate(
        flops=2 * rows * T * w_count,
        transcendentals=0,
        bytes_accessed=rows * T * itemsize + T * w_count * 4 + rows * w_count * 4,
    )

    out = pl.pallas_call(
        _dense_kernel,
        out_shape=jax.ShapeDtypeStruct((rows, w_count), jnp.float32),
        grid_spec=pltpu.PrefetchScalarGridSpec(
            num_scalar_prefetch=0,
            grid=(pl.cdiv(rows, tm),),
            in_specs=[
                # Streamed, unpadded row tiles of X (ragged last block is fine).
                pl.BlockSpec((tm, T), lambda i: (i, 0)),
                # Whole W with a constant block index -> resident across the grid.
                pl.BlockSpec((T, w_count), lambda i: (0, 0)),
            ],
            out_specs=pl.BlockSpec((tm, w_count), lambda i: (i, 0)),
        ),
        compiler_params=pltpu.CompilerParams(
            dimension_semantics=("parallel",),
            vmem_limit_bytes=vmem_limit,
        ),
        cost_estimate=cost,
    )(X2, W)
    return out.reshape(batch, n, w_count)


@functools.partial(
    jax.jit, static_argnames=("tm", "tw", "KB", "S", "w_count", "vmem_limit"))
def _run_banded(X, Wb, *, tm, tw, KB, S, w_count, vmem_limit):
    batch, n, T = X.shape
    num_j = Wb.shape[0]
    rows = batch * n
    num_kb = pl.cdiv(T, KB)
    X2 = X.reshape(rows, T)
    if X2.dtype != jnp.bfloat16 and X2.dtype != jnp.float32:
        X2 = X2.astype(jnp.float32)
    itemsize = X2.dtype.itemsize
    num_i = pl.cdiv(rows, tm)

    def x_map(i, j, s):
        # K block of the band for output block j; clamp so structurally-zero
        # trailing spans never index past the last K block (weights are 0 there).
        return (i, jnp.minimum(j + s, num_kb - 1))

    def w_map(i, j, s):
        return (j, s, 0, 0)

    def o_map(i, j, s):
        return (i, j)

    kernel = _make_banded_kernel(KB=KB, num_kb=num_kb, T=T, S=S)

    cost = pl.CostEstimate(
        flops=2 * rows * num_j * S * KB * tw,
        transcendentals=0,
        bytes_accessed=(S * rows * T * itemsize
                        + num_i * Wb.size * 4
                        + rows * w_count * 4),
    )

    out = pl.pallas_call(
        kernel,
        out_shape=jax.ShapeDtypeStruct((rows, w_count), jnp.float32),
        grid_spec=pltpu.PrefetchScalarGridSpec(
            num_scalar_prefetch=0,
            grid=(num_i, num_j, S),
            in_specs=[
                pl.BlockSpec((tm, KB), x_map),
                pl.BlockSpec((None, None, KB, tw), w_map),
            ],
            out_specs=pl.BlockSpec((tm, tw), o_map),
            scratch_shapes=[pltpu.VMEM((tm, tw), jnp.float32)],
        ),
        compiler_params=pltpu.CompilerParams(
            dimension_semantics=("parallel", "parallel", "arbitrary"),
            vmem_limit_bytes=vmem_limit,
        ),
        cost_estimate=cost,
    )(X2, Wb)
    return out.reshape(batch, n, w_count)


# ----------------------------------------------------------------------------
# Public wrapper
# ----------------------------------------------------------------------------


def ts_decaylinear(X, d: int = 10, stride: int = 10, *, force_banded=None):
    """X: (batch, n, T) -> Z: (batch, n, (T - d)//stride + 1) float32."""
    if X.ndim != 3:
        raise ValueError(f"expected X of shape (batch, n, T), got {X.shape}")
    batch, n, T = X.shape
    if d <= 0 or stride <= 0:
        raise ValueError(f"d and stride must be positive, got d={d}, stride={stride}")
    if T < d:
        raise ValueError(f"T ({T}) must be >= d ({d})")
    w_count = (T - d) // stride + 1
    rows = batch * n

    vmem_limit, budget = _vmem_plan()
    itemsize = 2 if X.dtype == jnp.bfloat16 else 4

    tw = 128  # output-column tile of the banded path (lane-aligned)
    use_banded = force_banded
    if use_banded is None:
        # Band-limit only when a VMEM-resident dense W would be uncomfortably big.
        use_banded = (w_count >= tw) and (2 * T * w_count * 4 > budget // 2)
    if use_banded and (w_count < tw
                       or T < tw * stride
                       or 4 * tw * tw * stride * 4 > budget):
        use_banded = False  # banded path not applicable/beneficial; dense is safe

    if use_banded:
        Wb, KB, S, _ = _banded_weights(T, d, stride, tw)
        tm = _pick_row_tile(
            rows,
            dma_row_bytes=KB * itemsize,
            vmem_row_bytes=(2 * KB * itemsize
                            + (KB * 4 if itemsize == 2 else 0)   # in-kernel f32 cast
                            + 3 * tw * 4),                       # 2 out bufs + acc
            budget=budget - 2 * KB * tw * 4,                     # minus W buffers
        )
        return _run_banded(X, Wb, tm=tm, tw=tw, KB=KB, S=S,
                           w_count=w_count, vmem_limit=vmem_limit)

    W = _dense_weights(T, d, stride)
    tm = _pick_row_tile(
        rows,
        dma_row_bytes=T * itemsize,
        vmem_row_bytes=(2 * T * itemsize
                        + (T * 4 if itemsize == 2 else 0)        # in-kernel f32 cast
                        + 2 * w_count * 4),
        budget=max(budget - 2 * T * w_count * 4, 2 * 1024 * 1024),
    )
    return _run_dense(X, W, tm=tm, vmem_limit=vmem_limit)


# ----------------------------------------------------------------------------
# Pure-JAX reference (mirrors the PyTorch loop) and self-test
# ----------------------------------------------------------------------------


def _reference(X, d, stride):
    batch, n, T = X.shape
    w_count = (T - d) // stride + 1
    wts = jnp.arange(1, d + 1, dtype=jnp.float32)
    wts = wts / jnp.sum(wts)
    cols = []
    for i in range(w_count):
        x = X[:, :, i * stride:i * stride + d].astype(jnp.float32)
        cols.append(jnp.einsum("bnd,d->bn", x, wts))
    return jnp.stack(cols, axis=-1)


if __name__ == "__main__":
    # Tolerance covers the TPU's default (bf16-pass) f32 matmul precision; any
    # windowing / weight-normalization bug would be orders of magnitude larger.
    ATOL = RTOL = 5e-3

    # Case 1: module defaults (d = stride = 10, non-overlapping windows).
    d, stride = 10, 10
    batch, n, T = 2, 8, 40                       # w = 4
    X = jax.random.normal(jax.random.PRNGKey(0), (batch, n, T), dtype=jnp.float32)
    Z = jax.block_until_ready(ts_decaylinear(X, d=d, stride=stride))
    assert Z.shape == (batch, n, (T - d) // stride + 1)
    assert Z.dtype == jnp.float32
    assert jnp.allclose(Z, _reference(X, d, stride), atol=ATOL, rtol=RTOL)

    # Case 2: overlapping windows, ragged row count (rows = 15), resident-W path.
    d2, stride2 = 8, 2
    X2 = jax.random.normal(jax.random.PRNGKey(1), (3, 5, 64), jnp.float32)
    Z2 = jax.block_until_ready(ts_decaylinear(X2, d=d2, stride=stride2))
    assert jnp.allclose(Z2, _reference(X2, d2, stride2), atol=ATOL, rtol=RTOL)

    # Case 3: force the band-limited path (stride=1, w >= 128, ragged K edge,
    # clamped trailing span) to exercise the accumulator / span machinery.
    d3, stride3 = 8, 1
    X3 = jax.random.normal(jax.random.PRNGKey(2), (2, 24, 140), jnp.float32)
    Z3 = jax.block_until_ready(
        ts_decaylinear(X3, d=d3, stride=stride3, force_banded=True))
    assert jnp.allclose(Z3, _reference(X3, d3, stride3), atol=ATOL, rtol=RTOL)

    # Case 4: bf16 input stays bf16 on the wire; weights stay exact f32 in-kernel.
    Xb = jax.random.normal(jax.random.PRNGKey(3), (2, 8, 40),
                           jnp.float32).astype(jnp.bfloat16)
    Zb = jax.block_until_ready(ts_decaylinear(Xb, d=10, stride=10))
    assert jnp.allclose(Zb, _reference(Xb.astype(jnp.float32), 10, 10),
                        atol=ATOL, rtol=RTOL)

    print("KERNEL_OK")
</pallas_src>

<mosaic_0001>
module attributes {stable_mosaic.version = 11 : i64} {
  func.func @_dense_kernel(%arg0: i32, %arg1: memref<8x40xf32, #tpu.memory_space<vmem>>, %arg2: memref<40x4xf32, #tpu.memory_space<vmem>>, %arg3: memref<8x4xf32, #tpu.memory_space<vmem>>) attributes {dimension_semantics = [#tpu.dimension_semantics<parallel>], iteration_bounds = array<i64: 2>, scalar_prefetch = 0 : i64, scratch_operands = 0 : i64, tpu.core_type = #tpu.core_type<tc>, window_params = [{transform_indices = @transform_0, window_bounds = array<i64: 8, 40>}, {pipeline_mode = #tpu.pipeline_mode<synchronous>, transform_indices = @transform_1, window_bounds = array<i64: 40, 4>}, {transform_indices = @transform_2, window_bounds = array<i64: 8, 4>}]} {
    %c0 = arith.constant 0 : index
    %c0_0 = arith.constant 0 : index
    %0 = vector.load %arg1[%c0, %c0_0] : memref<8x40xf32, #tpu.memory_space<vmem>>, vector<8x40xf32>
    %c0_1 = arith.constant 0 : index
    %c0_2 = arith.constant 0 : index
    %1 = vector.load %arg2[%c0_1, %c0_2] : memref<40x4xf32, #tpu.memory_space<vmem>>, vector<40x4xf32>
    %cst = arith.constant dense<0.000000e+00> : vector<8x4xf32>
    %2 = tpu.matmul %0, %1, %cst {dimension_numbers = #tpu.dot_dimension_numbers<[1], [0], [0], [1], [0, 0, 1, 1], [], []>} : vector<8x40xf32>, vector<40x4xf32>, vector<8x4xf32> -> vector<8x4xf32>
    %c0_3 = arith.constant 0 : index
    %c0_4 = arith.constant 0 : index
    %3 = vector.load %arg3[%c0_3, %c0_4] : memref<8x4xf32, #tpu.memory_space<vmem>>, vector<8x4xf32>
    tpu.vector_store %arg3[%c0_3, %c0_4], %2 {strides = array<i32>} : memref<8x4xf32, #tpu.memory_space<vmem>>, vector<8x4xf32>,
    return
  }
  func.func @transform_0(%arg0: i32) -> (i32, i32) {
    %c0_i32 = arith.constant 0 : i32
    %c0_i32_0 = arith.constant 0 : i32
    return %arg0, %c0_i32 : i32, i32
  }
  func.func @transform_1(%arg0: i32) -> (i32, i32) {
    %c0_i32 = arith.constant 0 : i32
    %c0_i32_0 = arith.constant 0 : i32
    %c0_i32_1 = arith.constant 0 : i32
    return %c0_i32, %c0_i32_0 : i32, i32
  }
  func.func @transform_2(%arg0: i32) -> (i32, i32) {
    %c0_i32 = arith.constant 0 : i32
    %c0_i32_0 = arith.constant 0 : i32
    return %arg0, %c0_i32 : i32, i32
  }
}

</mosaic_0001>

<llo_original>
// kernel: _run_dense.1
$region0: #{_run_dense.1}
  #allocation0 [shape = 'u32[]', space=smem, size = 0x4, offset = 0x4, fixed_abs, tag = 'smem constant byte address 0x4 - core index']
  #allocation1 [shape = 'u32[144,128]{1,0:T(1,128)}', space=vmem, size = 0x12000, scoped, tag = 'internal scratch']
  %s0 = inlined_call_operand.vmem [shape: f32[16,40], index: 0, kind: input, shape index: {}]
  %s1 = inlined_call_operand.vmem [shape: f32[40,4], index: 1, kind: input, shape index: {}]
  %s2 = inlined_call_operand.vmem [shape: f32[16,4], index: 2, kind: output, shape index: {}]
  %s3 = sld [smem:[#allocation0]]
  $region41: #{_run_dense.1} parent=0
    _
  %s5 = ssub.s32 1, %s3
  %s6 = scalar_select 0, %s5, %s3
  loop: start=0, step=1, limit=4
  $region2: #{_run_dense.1} parent=0 // loop_pre_header
    _
  $region3: #{_run_dense.1} parent=0 // loop_header
    %s8 = sphi 0, %s12
    %p9 = scmp.ge.s32.totalorder %s8, 4
    %s18 = sphi 0, %s20
    %s21 = sphi 0, %s18
    %s22 = sphi 0, %s21
    %s38 = sphi 0, %s22
    %s42 = sphi 0, %s42
    %s44 = sphi 0, %s42
    %s45 = sphi 0, %s44
    %s59 = sphi 0, %s45
    %s65 = sphi 0, %s67
    %s68 = sphi 0, %s65
    %s69 = sphi 0, %s68
    %s85 = sphi 0, %s69
  $region4: #{_run_dense.1} parent=0 // loop_header_branch
    %11 = sbr.rel (%p9) target = $region8
  $region5: #{_run_dense.1} parent=0 // loop_body
    %s13 = ssub.s32 %s8, 1
    %s14 = ssub.s32 %s8, 2
    %s15 = sadd.s32 %s8, 1
    %s16 = ssub.s32 %s8, %s15
    %p17 = scmp.eq.s32.totalorder %s16, 0
    %s19 = sadd.s32 %s18, 1
    %s20 = scalar_select %p17, %s18, %s19
    %p23 = pneg %p17
    %p24 = scmp.eq.s32.totalorder %s8, 1
    %p25 = por %p23, %p24
    %p26 = scmp.ne.s32.totalorder %s18, %s21
    %p27 = scmp.eq.s32.totalorder %s8, 0
    %p28 = por %p26, %p27
    %p29 = scmp.ne.s32.totalorder %s18, %s21
    %p30 = scmp.eq.s32.totalorder %s13, 1
    %p31 = por %p29, %p30
    %p32 = scmp.ne.s32.totalorder %s21, %s22
    %p33 = scmp.eq.s32.totalorder %s13, 0
    %p34 = por %p32, %p33
    %p35 = scmp.ne.s32.totalorder %s21, %s22
    %p36 = scmp.eq.s32.totalorder %s14, 1
    %p37 = por %p35, %p36
    %p39 = scmp.ne.s32.totalorder %s22, %s38
    %p40 = scmp.eq.s32.totalorder %s14, 0
    %p41 = por %p39, %p40
    %s43 = sadd.s32 %s42, 1
    %p46 = scmp.eq.s32.totalorder %s8, 1
    %p47 = scmp.ne.s32.totalorder %s42, %s44
    %p48 = scmp.eq.s32.totalorder %s8, 0
    %p49 = por %p47, %p48
    %p50 = scmp.ne.s32.totalorder %s42, %s44
    %p51 = scmp.eq.s32.totalorder %s13, 1
    %p52 = por %p50, %p51
    %p53 = scmp.ne.s32.totalorder %s44, %s45
    %p54 = scmp.eq.s32.totalorder %s13, 0
    %p55 = por %p53, %p54
    %p56 = scmp.ne.s32.totalorder %s44, %s45
    %p57 = scmp.eq.s32.totalorder %s14, 1
    %p58 = por %p56, %p57
    %p60 = scmp.ne.s32.totalorder %s45, %s59
    %p61 = scmp.eq.s32.totalorder %s14, 0
    %p62 = por %p60, %p61
    %s63 = ssub.s32 %s8, %s15
    %p64 = scmp.eq.s32.totalorder %s63, 0
    %s66 = sadd.s32 %s65, 1
    %s67 = scalar_select %p64, %s65, %s66
    %p70 = pneg %p64
    %p71 = scmp.eq.s32.totalorder %s8, 1
    %p72 = por %p70, %p71
    %p73 = scmp.ne.s32.totalorder %s65, %s68
    %p74 = scmp.eq.s32.totalorder %s8, 0
    %p75 = por %p73, %p74
    %p76 = scmp.ne.s32.totalorder %s65, %s68
    %p77 = scmp.eq.s32.totalorder %s13, 1
    %p78 = por %p76, %p77
    %p79 = scmp.ne.s32.totalorder %s68, %s69
    %p80 = scmp.eq.s32.totalorder %s13, 0
    %p81 = por %p79, %p80
    %p82 = scmp.ne.s32.totalorder %s68, %s69
    %p83 = scmp.eq.s32.totalorder %s14, 1
    %p84 = por %p82, %p83
    %p86 = scmp.ne.s32.totalorder %s69, %s85
    %p87 = scmp.eq.s32.totalorder %s14, 0
    %p88 = por %p86, %p87
    %p89 = scmp.le.s32.totalorder 1, %s8
    %p90 = scmp.lt.s32.totalorder %s8, 3
    %p91 = pnand %p89, %p90
    %p92 = pneg %p91
    // Predicated region
    $region9: #{_run_dense.1} parent=5 // pred_check
      _
    $region10: #{_run_dense.1} parent=5 // pred_check_branch
      %94 = sbr.rel (%p91) target = $region12
    $region11: #{_run_dense.1} parent=5 // pred_region
      %s95 = ssub.s32 %s8, 1
      // Predicated region
      $region13: #{_run_dense.1} parent=11 // pred_check
        %p96 = pneg %p55
      $region14: #{_run_dense.1} parent=11 // pred_check_branch
        %98 = sbr.rel (%p96) target = $region16
      $region15: #{_run_dense.1} parent=11 // pred_region
        _
      $region16: #{_run_dense.1} parent=11 // pred_fallthru
        _
    $region12: #{_run_dense.1} parent=5 // pred_fallthru
      _
    %p99 = scmp.lt.s32.totalorder %s8, 2
    // Predicated region
    $region17: #{_run_dense.1} parent=5 // pred_check
      %p100 = pneg %p99
    $region18: #{_run_dense.1} parent=5 // pred_check_branch
      %102 = sbr.rel (%p100) target = $region20
    $region19: #{_run_dense.1} parent=5 // pred_region
      // Predicated region
      $region21: #{_run_dense.1} parent=19 // pred_check
        %p103 = pneg %p28
      $region22: #{_run_dense.1} parent=19 // pred_check_branch
        %105 = sbr.rel (%p103) target = $region24
      $region23: #{_run_dense.1} parent=19 // pred_region
        %p106 = scmp.lt.s32.totalorder %s8, 1
        %s107 = scalar_select %p106, %s8, 1
        %s108 = smul.addr %s107, 8
        %s109 = scalar_lea.vmem %s0, %s108
      $region24: #{_run_dense.1} parent=19 // pred_fallthru
        _
    $region20: #{_run_dense.1} parent=5 // pred_fallthru
      _
    %p110 = scmp.le.s32.totalorder 1, %s8
    %p111 = scmp.lt.s32.totalorder %s8, 3
    %p112 = pnand %p110, %p111
    %p113 = pneg %p112
    // Predicated region
    $region25: #{_run_dense.1} parent=5 // pred_check
      _
    $region26: #{_run_dense.1} parent=5 // pred_check_branch
      %115 = sbr.rel (%p112) target = $region28
    $region27: #{_run_dense.1} parent=5 // pred_region
      %s116 = ssub.s32 %s8, 1
      %p117 = scmp.lt.s32.totalorder %s13, 1
      %s118 = scalar_select %p117, %s13, 1
      %s119 = smul.addr %s118, 8
      %s120 = scalar_lea.vmem %s0, %s119
      %p121 = pneg %p34
      %p122 = pneg %p31
      %p123 = pneg %p55
      %p124 = pneg %p52
      %p125 = pneg %p81
      %p126 = pneg %p78
      %p127 = scmp.lt.s32.totalorder %s13, 1
      %s128 = scalar_select %p127, %s13, 1
      %s129 = smul.addr %s128, 8
      %s130 = scalar_lea.vmem %s2, %s129
      %p131 = scmp.lt.s32.totalorder %s13, 1
      %s132 = scalar_select %p131, %s13, 1
      %s133 = smul.addr %s132, 8
      %s134 = scalar_lea.vmem %s0, %s133
      %p135 = scmp.lt.s32.totalorder %s13, 1
      %s136 = scalar_select %p135, %s13, 1
      %s137 = smul.addr %s136, 8
      %s138 = scalar_lea.vmem %s2, %s137
      %v139 = vld [vmem:[%s134] sm:$0xff]
      %v140 = vld [vmem:[%s1] sm:$0xff]
      %v141 = vld [vmem:[%s1 + $0x8] sm:$0xff]
      %v142 = vld [vmem:[%s1 + $0x10] sm:$0xff]
      %v143 = vld [vmem:[%s1 + $0x18] sm:$0xff]
      %v144 = vld [vmem:[%s1 + $0x20] sm:$0xff]
      %vm145 = vcmask 326656
      %v147 = vsel %vm145, %v139, 0
      %149 = vmatprep.subr.mxu0 0.0
      %150 = vmatpush1.msra.mxu0 0.0
      %151 = vmatprep.subr.mxu0 0.0
      %152 = vmatpush1.msra.mxu0 0.0
      %153 = vmatprep.subr.mxu0 0.0
      %154 = vmatpush1.msra.mxu0 0.0
      %155 = vmatprep.subr.mxu0 0.0
      %156 = vmatpush1.msra.mxu0 0.0
      %157 = vmatprep.subr.mxu0 0.0
      %158 = vmatpush1.msra.mxu0 0.0
      %159 = vmatprep.subr.mxu0 0.0
      %160 = vmatpush1.msra.mxu0 0.0
      %161 = vmatprep.subr.mxu0 0.0
      %162 = vmatpush1.msra.mxu0 0.0
      %163 = vmatprep.subr.mxu0 0.0
      %164 = vmatpush1.msra.mxu0 0.0
      %165 = vmatprep.subr.mxu0 0.0
      %166 = vmatpush1.msra.mxu0 0.0
      %167 = vmatprep.subr.mxu0 0.0
      %168 = vmatpush1.msra.mxu0 0.0
      %169 = vmatprep.subr.mxu0 0.0
      %170 = vmatpush1.msra.mxu0 0.0
      %171 = vmatprep.subr.mxu0 0.0
      %172 = vmatpush1.msra.mxu0 %v144
      %173 = vmatprep.subr.mxu0 0.0
      %174 = vmatpush1.msra.mxu0 %v143
      %175 = vmatprep.subr.mxu0 0.0
      %176 = vmatpush1.msra.mxu0 %v142
      %177 = vmatprep.subr.mxu0 0.0
      %178 = vmatpush1.msra.mxu0 %v141
      %179 = vmatprep.subr.mxu0 0.0
      %180 = vmatpush1.msra.mxu0 %v140
      %181 = vmatprep.subr.mxu0 0.0
      %182 = vmatpush2.msra.mxu0 0.0
      %183 = vmatprep.subr.mxu0 0.0
      %184 = vmatpush2.msra.mxu0 0.0
      %185 = vmatprep.subr.mxu0 0.0
      %186 = vmatpush2.msra.mxu0 0.0
      %187 = vmatprep.subr.mxu0 0.0
      %188 = vmatpush2.msra.mxu0 0.0
      %189 = vmatprep.subr.mxu0 0.0
      %190 = vmatpush2.msra.mxu0 0.0
      %191 = vmatprep.subr.mxu0 0.0
      %192 = vmatpush2.msra.mxu0 0.0
      %193 = vmatprep.subr.mxu0 0.0
      %194 = vmatpush2.msra.mxu0 0.0
      %195 = vmatprep.subr.mxu0 0.0
      %196 = vmatpush2.msra.mxu0 0.0
      %197 = vmatprep.subr.mxu0 0.0
      %198 = vmatpush2.msra.mxu0 0.0
      %199 = vmatprep.subr.mxu0 0.0
      %200 = vmatpush2.msra.mxu0 0.0
      %201 = vmatprep.subr.mxu0 0.0
      %202 = vmatpush2.msra.mxu0 0.0
      %203 = vmatprep.subr.mxu0 0.0
      %204 = vmatpush2.msra.mxu0 0.0
      %205 = vmatprep.subr.mxu0 0.0
      %206 = vmatpush2.msra.mxu0 0.0
      %207 = vmatprep.subr.mxu0 0.0
      %208 = vmatpush2.msra.mxu0 0.0
      %209 = vmatprep.subr.mxu0 0.0
      %210 = vmatpush2.msra.mxu0 0.0
      %211 = vmatprep.subr.mxu0 0.0
      %212 = vmatpush2.msra.mxu0 0.0
      %213 = vmatprep.mubr.f32.mxu0 0.0
      %214 = vmatmul.mubr.f32.gmra.mxu0 %v147
      %v215 = vpop.f32.mrf.mxu0
      %v216 = vadd.f32 0.0, %v215
      %v217 = vpop.f32.mrf.mxu0
      %218 = vdwg.mxu0
      %vm219 = vcmask 31744
      %220 = vst.msk [vmem:[%s138] sm:$0xff] %vm219, %v216
      %p221 = scmp.lt.s32.totalorder %s13, 1
      %s222 = scalar_select %p221, %s13, 1
      %s223 = smul.addr %s222, 8
      %s224 = scalar_lea.vmem %s2, %s223
      // Predicated region
      $region29: #{_run_dense.1} parent=27 // pred_check
        %p225 = pneg %p78
      $region30: #{_run_dense.1} parent=27 // pred_check_branch
        %227 = sbr.rel (%p225) target = $region32
      $region31: #{_run_dense.1} parent=27 // pred_region
        _
      $region32: #{_run_dense.1} parent=27 // pred_fallthru
        _
    $region28: #{_run_dense.1} parent=5 // pred_fallthru
      _
    %p228 = scmp.le.s32.totalorder 2, %s8
    // Predicated region
    $region33: #{_run_dense.1} parent=5 // pred_check
      %p229 = pneg %p228
    $region34: #{_run_dense.1} parent=5 // pred_check_branch
      %231 = sbr.rel (%p229) target = $region36
    $region35: #{_run_dense.1} parent=5 // pred_region
      %s232 = ssub.s32 %s8, 2
      // Predicated region
      $region37: #{_run_dense.1} parent=35 // pred_check
        %p233 = pneg %p84
      $region38: #{_run_dense.1} parent=35 // pred_check_branch
        %235 = sbr.rel (%p233) target = $region40
      $region39: #{_run_dense.1} parent=35 // pred_region
        %p236 = scmp.lt.s32.totalorder %s14, 1
        %s237 = scalar_select %p236, %s14, 1
        %s238 = smul.addr %s237, 8
        %s239 = scalar_lea.vmem %s2, %s238
      $region40: #{_run_dense.1} parent=35 // pred_fallthru
        _
    $region36: #{_run_dense.1} parent=5 // pred_fallthru
      _
  $region6: #{_run_dense.1} parent=0 // loop_footer
    %s12 = sadd.s32 1, %s8
  $region7: #{_run_dense.1} parent=0 // loop_footer_branch
    %7 = sbr.rel target = $region3
  $region8: #{_run_dense.1} parent=0 // loop_exit
    _

</llo_original>
